<compile_context>
chip_gen: v5e
topology: v5e:2x2
jax: 0.10.0
libtpu: 0.0.40
codegen_flags: <defaults>
</compile_context>

<pallas_src>
import jax
import jax.numpy as jnp
from jax import lax
from jax.experimental import pallas as pl
from jax.experimental.pallas import tpu as pltpu

_LANE = 128   # lane width; feature dims are zero-padded to a multiple of this
_ROW = 16     # row (sublane) multiple; 16 covers bf16 packing (and is a multiple of 8)


def _round_up(x, m):
    return ((x + m - 1) // m) * m


def _make_mlp_kernel(n_layers):
    """Kernel refs: (x_ref, W0, b0, W1, b1, ..., W_{L-1}, b_{L-1}, out_ref)."""

    def kernel(*refs):
        x_ref = refs[0]
        out_ref = refs[-1]

        h = x_ref[...]                                           # (TILE_N, D0_pad)
        for l in range(n_layers):
            w = refs[1 + 2 * l][...]                             # (Din_pad, Dout_pad) bf16
            b = refs[2 + 2 * l][...]                             # (1, Dout_pad) f32
            z = jnp.dot(h.astype(jnp.bfloat16), w,
                        preferred_element_type=jnp.float32) + b  # f32 accumulate
            h = jnp.maximum(z, 0.0) if l < n_layers - 1 else z   # ReLU (BN folded)

        # F.normalize(dim=1): x / max(||x||, 1e-12) == x * rsqrt(max(||x||^2, 1e-24)).
        ss = jnp.sum(h * h, axis=1, keepdims=True)
        inv = lax.rsqrt(jnp.maximum(ss, 1e-24))                  # EUP slot
        out_ref[...] = (h * inv).astype(out_ref.dtype)

    return kernel


def _vmem_limit_bytes(tile_n, d_pad, x_itemsize, out_itemsize, weight_bufs):
    n_layers = len(d_pad) - 1
    b = 2 * tile_n * d_pad[0] * x_itemsize          # input windows (double-buffered)
    b += 2 * tile_n * d_pad[-1] * out_itemsize      # output windows (double-buffered)
    for l in range(n_layers):
        b += weight_bufs * d_pad[l] * d_pad[l + 1] * 2   # bf16 resident weights
        b += weight_bufs * d_pad[l + 1] * 4              # f32 bias rows
    b += 4 * tile_n * max(d_pad) * 4                # live f32/bf16 intermediates (generous)
    b = int(b * 1.5) + (2 << 20)                    # ~50% headroom + slack
    return int(min(max(b, 16 << 20), 64 << 20))     # floor 16 MiB, cap at v7x's 64 MiB


def contrastive_forward(x, params, *, tile_n=512, out_dtype=jnp.float32):
    """Inference forward of ContrastiveRepresentation.

    x:      (N, dims[0]) float32 (or bfloat16)
    params: list (one per Linear layer) of dicts with
              'W' (out, in), 'b' (out,)
            and, for every layer except the last, BatchNorm eval params
              'gamma', 'beta', 'mean', 'var', 'eps'.
    Returns (N, dims[-1]) `out_dtype`, rows L2-normalized.
    """
    n_layers = len(params)
    N, D0 = x.shape
    dims = [D0] + [int(p["W"].shape[0]) for p in params]

    # ---- Host-side prep: fold BN(eval) into the Linear, pre-transpose to (in, out). ----
    ws, bs = [], []
    for i, p in enumerate(params):
        W = p["W"].astype(jnp.float32)                          # (out, in)
        b = p["b"].astype(jnp.float32)                          # (out,)
        if i < n_layers - 1:
            scale = (p["gamma"] / jnp.sqrt(p["var"] + p["eps"])).astype(jnp.float32)
            shift = (p["beta"] - p["mean"] * scale).astype(jnp.float32)
            W = W * scale[:, None]
            b = b * scale + shift
        ws.append(W.T)                                          # (in, out)
        bs.append(b)

    d_pad = [_round_up(d, _LANE) for d in dims]

    # ---- Row tiling: pad rows only to the sublane multiple; keep padded tail small;
    #      guarantee >= 2 grid steps for non-tiny batches (v7x megacore sharding). ----
    n_min = _round_up(N, _ROW)
    tn = max(_ROW, min(int(tile_n), n_min))
    if tn > 128 and n_min <= tn:                     # single step would idle one v7x TC
        tn = max(128, _round_up(pl.cdiv(n_min, 2), _ROW))
    g = pl.cdiv(n_min, tn)
    tn = _round_up(pl.cdiv(n_min, g), _ROW)          # shrink tile -> tail pad < one row block
    n_pad = g * tn

    # ---- x: skip the host-side pad copy if already aligned, else fuse pad + bf16 cast. ----
    if N == n_pad and D0 == d_pad[0]:
        x_p = x                                      # no extra HBM copy; kernel casts per tile
    else:
        x_p = (jnp.zeros((n_pad, d_pad[0]), jnp.bfloat16)
               .at[:N, :D0].set(x.astype(jnp.bfloat16)))

    # ---- Weights/biases: zero-pad to lane multiples (exact padding: zero weights/bias
    #      keep padded features exactly 0, contributing 0 to the L2 norm). ----
    args = [x_p]
    for i in range(n_layers):
        w_p = (jnp.zeros((d_pad[i], d_pad[i + 1]), jnp.bfloat16)
               .at[: dims[i], : dims[i + 1]].set(ws[i].astype(jnp.bfloat16)))
        b_p = (jnp.zeros((1, d_pad[i + 1]), jnp.float32)
               .at[0, : dims[i + 1]].set(bs[i]))
        args += [w_p, b_p]

    out_itemsize = jnp.dtype(out_dtype).itemsize
    x_itemsize = jnp.dtype(x_p.dtype).itemsize

    def run(single_buffer_weights):
        # Grid-invariant weights/biases: constant index_map; request a single VMEM buffer.
        wkw = dict(pipeline_mode=pl.Buffered(1)) if single_buffer_weights else {}
        in_specs = [pl.BlockSpec((tn, d_pad[0]), lambda i: (i, 0))]
        for l in range(n_layers):
            in_specs.append(pl.BlockSpec((d_pad[l], d_pad[l + 1]), lambda i: (0, 0), **wkw))
            in_specs.append(pl.BlockSpec((1, d_pad[l + 1]), lambda i: (0, 0), **wkw))
        out_specs = pl.BlockSpec((tn, d_pad[-1]), lambda i: (i, 0))

        vmem_limit = _vmem_limit_bytes(tn, d_pad, x_itemsize, out_itemsize,
                                       1 if single_buffer_weights else 2)
        return pl.pallas_call(
            _make_mlp_kernel(n_layers),
            out_shape=jax.ShapeDtypeStruct((n_pad, d_pad[-1]), out_dtype),
            grid_spec=pltpu.PrefetchScalarGridSpec(
                num_scalar_prefetch=0,
                grid=(n_pad // tn,),
                in_specs=in_specs,
                out_specs=out_specs,
            ),
            compiler_params=pltpu.CompilerParams(
                dimension_semantics=("parallel",),
                vmem_limit_bytes=vmem_limit,
            ),
        )(*args)

    try:
        out = run(single_buffer_weights=True)
    except Exception:
        # Fallback for JAX/Mosaic builds that reject Buffered(1) on grid-invariant inputs.
        out = run(single_buffer_weights=False)

    return out[:N, : dims[-1]]


# --------------------------- demo / correctness check ---------------------------

def _init_params(key, dims):
    """Matches the PyTorch module's init: xavier_uniform_ weights, default Linear bias,
    freshly-initialized BatchNorm1d (gamma=1, beta=0, running_mean=0, running_var=1)."""
    params = []
    n_layers = len(dims) - 1
    for i in range(n_layers):
        key, kw, kb = jax.random.split(key, 3)
        fan_in, fan_out = dims[i], dims[i + 1]
        bound_w = jnp.sqrt(6.0 / (fan_in + fan_out))
        W = jax.random.uniform(kw, (fan_out, fan_in), jnp.float32, -bound_w, bound_w)
        bound_b = 1.0 / jnp.sqrt(fan_in)
        b = jax.random.uniform(kb, (fan_out,), jnp.float32, -bound_b, bound_b)
        p = {"W": W, "b": b}
        if i < n_layers - 1:
            p.update(
                gamma=jnp.ones((fan_out,), jnp.float32),
                beta=jnp.zeros((fan_out,), jnp.float32),
                mean=jnp.zeros((fan_out,), jnp.float32),
                var=jnp.ones((fan_out,), jnp.float32),
                eps=1e-5,
            )
        params.append(p)
    return params


def _reference(x, params):
    """Pure-JAX eval-mode forward matching the PyTorch module (f32 throughout)."""
    h = x.astype(jnp.float32)
    n_layers = len(params)
    for i, p in enumerate(params):
        h = jnp.dot(h, p["W"].T, precision=lax.Precision.HIGHEST) + p["b"]
        if i < n_layers - 1:
            scale = p["gamma"] / jnp.sqrt(p["var"] + p["eps"])
            h = (h - p["mean"]) * scale + p["beta"]
            h = jnp.maximum(h, 0.0)
    norm = jnp.sqrt(jnp.sum(h * h, axis=1, keepdims=True))
    return h / jnp.maximum(norm, 1e-12)


if __name__ == "__main__":
    key = jax.random.PRNGKey(0)
    k_x, k_p = jax.random.split(key)

    # Small shapes: dims = [32, 64, 16] -> Dropout, Linear(32,64)+BN+ReLU, Linear(64,16), normalize.
    dims = (32, 64, 16)
    N = 8
    x = jax.random.normal(k_x, (N, dims[0]), dtype=jnp.float32)
    params = _init_params(k_p, dims)

    out = contrastive_forward(x, params)
    jax.block_until_ready(out)

    ref = _reference(x, params)
    assert out.shape == (N, dims[-1])
    # bf16 MXU inputs -> ~1e-2-level error pre-normalize, mostly washed out by the L2 norm.
    err = float(jnp.max(jnp.abs(out - ref)))
    assert jnp.allclose(out, ref, atol=2e-2, rtol=2e-2), err

    print("KERNEL_OK")
</pallas_src>

<mosaic_0001>
module attributes {stable_mosaic.version = 11 : i64} {
  func.func @kernel(%arg0: i32, %arg1: memref<16x128xbf16, #tpu.memory_space<vmem>>, %arg2: memref<128x128xbf16, #tpu.memory_space<vmem>>, %arg3: memref<1x128xf32, #tpu.memory_space<vmem>>, %arg4: memref<128x128xbf16, #tpu.memory_space<vmem>>, %arg5: memref<1x128xf32, #tpu.memory_space<vmem>>, %arg6: memref<16x128xf32, #tpu.memory_space<vmem>>) attributes {dimension_semantics = [#tpu.dimension_semantics<parallel>], iteration_bounds = array<i64: 1>, scalar_prefetch = 0 : i64, scratch_operands = 0 : i64, tpu.core_type = #tpu.core_type<tc>, window_params = [{transform_indices = @transform_0, window_bounds = array<i64: 16, 128>}, {pipeline_mode = #tpu.pipeline_mode<synchronous>, transform_indices = @transform_1, window_bounds = array<i64: 128, 128>}, {pipeline_mode = #tpu.pipeline_mode<synchronous>, transform_indices = @transform_2, window_bounds = array<i64: 1, 128>}, {pipeline_mode = #tpu.pipeline_mode<synchronous>, transform_indices = @transform_3, window_bounds = array<i64: 128, 128>}, {pipeline_mode = #tpu.pipeline_mode<synchronous>, transform_indices = @transform_4, window_bounds = array<i64: 1, 128>}, {transform_indices = @transform_5, window_bounds = array<i64: 16, 128>}]} {
    %c0 = arith.constant 0 : index
    %c0_0 = arith.constant 0 : index
    %0 = vector.load %arg1[%c0, %c0_0] : memref<16x128xbf16, #tpu.memory_space<vmem>>, vector<16x128xbf16>
    %c0_1 = arith.constant 0 : index
    %c0_2 = arith.constant 0 : index
    %1 = vector.load %arg2[%c0_1, %c0_2] : memref<128x128xbf16, #tpu.memory_space<vmem>>, vector<128x128xbf16>
    %c0_3 = arith.constant 0 : index
    %c0_4 = arith.constant 0 : index
    %2 = vector.load %arg3[%c0_3, %c0_4] : memref<1x128xf32, #tpu.memory_space<vmem>>, vector<1x128xf32>
    %cst = arith.constant dense<0.000000e+00> : vector<16x128xf32>
    %3 = tpu.matmul %0, %1, %cst {dimension_numbers = #tpu.dot_dimension_numbers<[1], [0], [0], [1], [0, 0, 1, 1], [], []>} : vector<16x128xbf16>, vector<128x128xbf16>, vector<16x128xf32> -> vector<16x128xf32>
    %4 = vector.broadcast %2 : vector<1x128xf32> to vector<16x128xf32>
    %5 = arith.addf %3, %4 : vector<16x128xf32>
    %cst_5 = arith.constant 0.000000e+00 : f32
    %6 = vector.broadcast %cst_5 : f32 to vector<16x128xf32>
    %7 = arith.maximumf %5, %6 : vector<16x128xf32>
    %c0_6 = arith.constant 0 : index
    %c0_7 = arith.constant 0 : index
    %8 = vector.load %arg4[%c0_6, %c0_7] : memref<128x128xbf16, #tpu.memory_space<vmem>>, vector<128x128xbf16>
    %c0_8 = arith.constant 0 : index
    %c0_9 = arith.constant 0 : index
    %9 = vector.load %arg5[%c0_8, %c0_9] : memref<1x128xf32, #tpu.memory_space<vmem>>, vector<1x128xf32>
    %10 = arith.truncf %7 : vector<16x128xf32> to vector<16x128xbf16>
    %cst_10 = arith.constant dense<0.000000e+00> : vector<16x128xf32>
    %11 = tpu.matmul %10, %8, %cst_10 {dimension_numbers = #tpu.dot_dimension_numbers<[1], [0], [0], [1], [0, 0, 1, 1], [], []>} : vector<16x128xbf16>, vector<128x128xbf16>, vector<16x128xf32> -> vector<16x128xf32>
    %12 = vector.broadcast %9 : vector<1x128xf32> to vector<16x128xf32>
    %13 = arith.addf %11, %12 : vector<16x128xf32>
    %14 = arith.mulf %13, %13 : vector<16x128xf32>
    %cst_11 = arith.constant dense<0.000000e+00> : vector<16xf32>
    %15 = vector.multi_reduction <add>, %14, %cst_11 [1] : vector<16x128xf32> to vector<16xf32>
    %16 = vector.shape_cast %15 : vector<16xf32> to vector<16x1xf32>
    %cst_12 = arith.constant 1.000000e-24 : f32
    %17 = vector.broadcast %cst_12 : f32 to vector<16x1xf32>
    %18 = arith.maximumf %16, %17 : vector<16x1xf32>
    %19 = math.rsqrt %18 : vector<16x1xf32>
    %20 = vector.broadcast %19 : vector<16x1xf32> to vector<16x128xf32>
    %21 = arith.mulf %13, %20 : vector<16x128xf32>
    %c0_13 = arith.constant 0 : index
    %c0_14 = arith.constant 0 : index
    %22 = vector.load %arg6[%c0_13, %c0_14] : memref<16x128xf32, #tpu.memory_space<vmem>>, vector<16x128xf32>
    tpu.vector_store %arg6[%c0_13, %c0_14], %21 {strides = array<i32>} : memref<16x128xf32, #tpu.memory_space<vmem>>, vector<16x128xf32>,
    return
  }
  func.func @transform_0(%arg0: i32) -> (i32, i32) {
    %c0_i32 = arith.constant 0 : i32
    %c0_i32_0 = arith.constant 0 : i32
    return %arg0, %c0_i32 : i32, i32
  }
  func.func @transform_1(%arg0: i32) -> (i32, i32) {
    %c0_i32 = arith.constant 0 : i32
    %c0_i32_0 = arith.constant 0 : i32
    %c0_i32_1 = arith.constant 0 : i32
    return %c0_i32, %c0_i32_0 : i32, i32
  }
  func.func @transform_2(%arg0: i32) -> (i32, i32) {
    %c0_i32 = arith.constant 0 : i32
    %c0_i32_0 = arith.constant 0 : i32
    %c0_i32_1 = arith.constant 0 : i32
    return %c0_i32, %c0_i32_0 : i32, i32
  }
  func.func @transform_3(%arg0: i32) -> (i32, i32) {
    %c0_i32 = arith.constant 0 : i32
    %c0_i32_0 = arith.constant 0 : i32
    %c0_i32_1 = arith.constant 0 : i32
    return %c0_i32, %c0_i32_0 : i32, i32
  }
  func.func @transform_4(%arg0: i32) -> (i32, i32) {
    %c0_i32 = arith.constant 0 : i32
    %c0_i32_0 = arith.constant 0 : i32
    %c0_i32_1 = arith.constant 0 : i32
    return %c0_i32, %c0_i32_0 : i32, i32
  }
  func.func @transform_5(%arg0: i32) -> (i32, i32) {
    %c0_i32 = arith.constant 0 : i32
    %c0_i32_0 = arith.constant 0 : i32
    return %arg0, %c0_i32 : i32, i32
  }
}

module attributes {stable_mosaic.version = 11 : i64} {
  func.func @kernel(%arg0: i32, %arg1: memref<16x128xbf16, #tpu.memory_space<vmem>>, %arg2: memref<128x128xbf16, #tpu.memory_space<vmem>>, %arg3: memref<1x128xf32, #tpu.memory_space<vmem>>, %arg4: memref<128x128xbf16, #tpu.memory_space<vmem>>, %arg5: memref<1x128xf32, #tpu.memory_space<vmem>>, %arg6: memref<16x128xf32, #tpu.memory_space<vmem>>) attributes {dimension_semantics = [#tpu.dimension_semantics<parallel>], iteration_bounds = array<i64: 1>, scalar_prefetch = 0 : i64, scratch_operands = 0 : i64, tpu.core_type = #tpu.core_type<tc>, window_params = [{transform_indices = @transform_0, window_bounds = array<i64: 16, 128>}, {pipeline_mode = #tpu.pipeline_mode<synchronous>, transform_indices = @transform_1, window_bounds = array<i64: 128, 128>}, {pipeline_mode = #tpu.pipeline_mode<synchronous>, transform_indices = @transform_2, window_bounds = array<i64: 1, 128>}, {pipeline_mode = #tpu.pipeline_mode<synchronous>, transform_indices = @transform_3, window_bounds = array<i64: 128, 128>}, {pipeline_mode = #tpu.pipeline_mode<synchronous>, transform_indices = @transform_4, window_bounds = array<i64: 1, 128>}, {transform_indices = @transform_5, window_bounds = array<i64: 16, 128>}]} {
    %c0 = arith.constant 0 : index
    %c0_0 = arith.constant 0 : index
    %0 = vector.load %arg1[%c0, %c0_0] : memref<16x128xbf16, #tpu.memory_space<vmem>>, vector<16x128xbf16>
    %c0_1 = arith.constant 0 : index
    %c0_2 = arith.constant 0 : index
    %1 = vector.load %arg2[%c0_1, %c0_2] : memref<128x128xbf16, #tpu.memory_space<vmem>>, vector<128x128xbf16>
    %c0_3 = arith.constant 0 : index
    %c0_4 = arith.constant 0 : index
    %2 = vector.load %arg3[%c0_3, %c0_4] : memref<1x128xf32, #tpu.memory_space<vmem>>, vector<1x128xf32>
    %cst = arith.constant dense<0.000000e+00> : vector<16x128xf32>
    %3 = tpu.matmul %0, %1, %cst {dimension_numbers = #tpu.dot_dimension_numbers<[1], [0], [0], [1], [0, 0, 1, 1], [], []>} : vector<16x128xbf16>, vector<128x128xbf16>, vector<16x128xf32> -> vector<16x128xf32>
    %4 = vector.broadcast %2 : vector<1x128xf32> to vector<16x128xf32>
    %5 = arith.addf %3, %4 : vector<16x128xf32>
    %cst_5 = arith.constant 0.000000e+00 : f32
    %6 = vector.broadcast %cst_5 : f32 to vector<16x128xf32>
    %7 = arith.maximumf %5, %6 : vector<16x128xf32>
    %c0_6 = arith.constant 0 : index
    %c0_7 = arith.constant 0 : index
    %8 = vector.load %arg4[%c0_6, %c0_7] : memref<128x128xbf16, #tpu.memory_space<vmem>>, vector<128x128xbf16>
    %c0_8 = arith.constant 0 : index
    %c0_9 = arith.constant 0 : index
    %9 = vector.load %arg5[%c0_8, %c0_9] : memref<1x128xf32, #tpu.memory_space<vmem>>, vector<1x128xf32>
    %10 = arith.truncf %7 : vector<16x128xf32> to vector<16x128xbf16>
    %cst_10 = arith.constant dense<0.000000e+00> : vector<16x128xf32>
    %11 = tpu.matmul %10, %8, %cst_10 {dimension_numbers = #tpu.dot_dimension_numbers<[1], [0], [0], [1], [0, 0, 1, 1], [], []>} : vector<16x128xbf16>, vector<128x128xbf16>, vector<16x128xf32> -> vector<16x128xf32>
    %12 = vector.broadcast %9 : vector<1x128xf32> to vector<16x128xf32>
    %13 = arith.addf %11, %12 : vector<16x128xf32>
    %14 = arith.mulf %13, %13 : vector<16x128xf32>
    %cst_11 = arith.constant dense<0.000000e+00> : vector<16xf32>
    %15 = vector.multi_reduction <add>, %14, %cst_11 [1] : vector<16x128xf32> to vector<16xf32>
    %16 = vector.shape_cast %15 : vector<16xf32> to vector<16x1xf32>
    %cst_12 = arith.constant 1.000000e-24 : f32
    %17 = vector.broadcast %cst_12 : f32 to vector<16x1xf32>
    %18 = arith.maximumf %16, %17 : vector<16x1xf32>
    %19 = math.rsqrt %18 : vector<16x1xf32>
    %20 = vector.broadcast %19 : vector<16x1xf32> to vector<16x128xf32>
    %21 = arith.mulf %13, %20 : vector<16x128xf32>
    %c0_13 = arith.constant 0 : index
    %c0_14 = arith.constant 0 : index
    %22 = vector.load %arg6[%c0_13, %c0_14] : memref<16x128xf32, #tpu.memory_space<vmem>>, vector<16x128xf32>
    tpu.vector_store %arg6[%c0_13, %c0_14], %21 {strides = array<i32>} : memref<16x128xf32, #tpu.memory_space<vmem>>, vector<16x128xf32>,
    return
  }
  func.func @transform_0(%arg0: i32) -> (i32, i32) {
    %c0_i32 = arith.constant 0 : i32
    %c0_i32_0 = arith.constant 0 : i32
    return %arg0, %c0_i32 : i32, i32
  }
  func.func @transform_1(%arg0: i32) -> (i32, i32) {
    %c0_i32 = arith.constant 0 : i32
    %c0_i32_0 = arith.constant 0 : i32
    %c0_i32_1 = arith.constant 0 : i32
    return %c0_i32, %c0_i32_0 : i32, i32
  }
  func.func @transform_2(%arg0: i32) -> (i32, i32) {
    %c0_i32 = arith.constant 0 : i32
    %c0_i32_0 = arith.constant 0 : i32
    %c0_i32_1 = arith.constant 0 : i32
    return %c0_i32, %c0_i32_0 : i32, i32
  }
  func.func @transform_3(%arg0: i32) -> (i32, i32) {
    %c0_i32 = arith.constant 0 : i32
    %c0_i32_0 = arith.constant 0 : i32
    %c0_i32_1 = arith.constant 0 : i32
    return %c0_i32, %c0_i32_0 : i32, i32
  }
  func.func @transform_4(%arg0: i32) -> (i32, i32) {
    %c0_i32 = arith.constant 0 : i32
    %c0_i32_0 = arith.constant 0 : i32
    %c0_i32_1 = arith.constant 0 : i32
    return %c0_i32, %c0_i32_0 : i32, i32
  }
  func.func @transform_5(%arg0: i32) -> (i32, i32) {
    %c0_i32 = arith.constant 0 : i32
    %c0_i32_0 = arith.constant 0 : i32
    return %arg0, %c0_i32 : i32, i32
  }
}

</mosaic_0001>

<llo_original>
// kernel: tpu_custom_call.1
$region0: #{tpu_custom_call.1}
  #allocation0 [shape = 'u32[]', space=smem, size = 0x4, offset = 0x4, fixed_abs, tag = 'smem constant byte address 0x4 - core index']
  #allocation1 [shape = 'u32[72,128]{1,0:T(1,128)}', space=vmem, size = 0x9000, scoped, tag = 'internal scratch']
  %s0 = inlined_call_operand.hbm [shape: bf16[16,128], index: 0, kind: input, shape index: {}]
  %s1 = inlined_call_operand.hbm [shape: bf16[128,128], index: 1, kind: input, shape index: {}]
  %s2 = inlined_call_operand.vmem [shape: f32[1,128], index: 2, kind: input, shape index: {}]
  %s3 = inlined_call_operand.hbm [shape: bf16[128,128], index: 3, kind: input, shape index: {}]
  %s4 = inlined_call_operand.vmem [shape: f32[1,128], index: 4, kind: input, shape index: {}]
  %s5 = inlined_call_operand.hbm [shape: f32[16,128], index: 5, kind: output, shape index: {}]
  %s6 = sld [smem:[#allocation0]]
  $region42: #{tpu_custom_call.1} parent=0
    _
  %s8 = ssub.s32 1, %s6
  %s9 = scalar_select 0, %s8, %s6
  $region1: #{tpu_custom_call.1} parent=0
    #allocation2 [shape = 'u8[4096]{0}', space=vmem, size = 0x1000, scoped, tag = 'input window, operand 0, single buffered']
    #allocation3 [shape = 's32[1]{0}', space=sflag, size = 0x4, scoped, tag = 'scoped memory for tpu_custom_call.1']
    #allocation4 [shape = 's32[1]{0}', space=sflag, size = 0x4, scoped, tag = 'scoped memory for tpu_custom_call.1']
    #allocation5 [shape = 'u8[32768]{0}', space=vmem, size = 0x8000, scoped, tag = 'input window, operand 1, single buffered']
    #allocation6 [shape = 's32[1]{0}', space=sflag, size = 0x4, scoped, tag = 'scoped memory for tpu_custom_call.1']
    #allocation7 [shape = 'u8[32768]{0}', space=vmem, size = 0x8000, scoped, tag = 'input window, operand 3, single buffered']
    #allocation8 [shape = 'u8[8192]{0}', space=vmem, size = 0x2000, scoped, tag = 'output window, operand 0, single buffered']
    %10 = vsyncpa [#allocation3], 0
    %11 = vsyncpa [#allocation6], 0
    %12 = vsyncpa [#allocation4], 0
    // Predicated region
    $region2: #{tpu_custom_call.1} parent=1 // pred_check
      _
    $region3: #{tpu_custom_call.1} parent=1 // pred_check_branch
      %14 = sbr.rel (0) target = $region5
    $region4: #{tpu_custom_call.1} parent=1 // pred_region
      %16 = vsyncadd [#allocation3], 0
      %s17 = sshll.u32 %s0, 4
      %s18 = int_to_ptr.hbm [resolvable:$true] %s17
      %s19 = sshll.u32 [#allocation2], 4
      %s20 = int_to_ptr.vmem [resolvable:$true] %s19
      %25 = dma.hbm_to_vmem [thread:$0]  %s18, 128, %s20, [#allocation3], 64, 64, 4
    $region5: #{tpu_custom_call.1} parent=1 // pred_fallthru
      _
    // Predicated region
    $region6: #{tpu_custom_call.1} parent=1 // pred_check
      _
    $region7: #{tpu_custom_call.1} parent=1 // pred_check_branch
      %27 = sbr.rel (0) target = $region9
    $region8: #{tpu_custom_call.1} parent=1 // pred_region
      %29 = vsyncadd [#allocation6], 0
      %s30 = sshll.u32 %s1, 4
      %s31 = int_to_ptr.hbm [resolvable:$true] %s30
      %s32 = sshll.u32 [#allocation5], 4
      %s33 = int_to_ptr.vmem [resolvable:$true] %s32
      %38 = dma.hbm_to_vmem [thread:$0]  %s31, 1024, %s33, [#allocation6], 64, 64, 4
    $region9: #{tpu_custom_call.1} parent=1 // pred_fallthru
      _
    // Predicated region
    $region10: #{tpu_custom_call.1} parent=1 // pred_check
      _
    $region11: #{tpu_custom_call.1} parent=1 // pred_check_branch
      %40 = sbr.rel (0) target = $region13
    $region12: #{tpu_custom_call.1} parent=1 // pred_region
      _
    $region13: #{tpu_custom_call.1} parent=1 // pred_fallthru
      _
    // Predicated region
    $region14: #{tpu_custom_call.1} parent=1 // pred_check
      _
    $region15: #{tpu_custom_call.1} parent=1 // pred_check_branch
      %42 = sbr.rel (0) target = $region17
    $region16: #{tpu_custom_call.1} parent=1 // pred_region
      %44 = vsyncadd [#allocation6], 0
      %s45 = sshll.u32 %s3, 4
      %s46 = int_to_ptr.hbm [resolvable:$true] %s45
      %s47 = sshll.u32 [#allocation7], 4
      %s48 = int_to_ptr.vmem [resolvable:$true] %s47
      %53 = dma.hbm_to_vmem [thread:$0]  %s46, 1024, %s48, [#allocation6], 64, 64, 4
    $region17: #{tpu_custom_call.1} parent=1 // pred_fallthru
      _
    // Predicated region
    $region18: #{tpu_custom_call.1} parent=1 // pred_check
      _
    $region19: #{tpu_custom_call.1} parent=1 // pred_check_branch
      %55 = sbr.rel (0) target = $region21
    $region20: #{tpu_custom_call.1} parent=1 // pred_region
      _
    $region21: #{tpu_custom_call.1} parent=1 // pred_fallthru
      _
    // Predicated region
    $region22: #{tpu_custom_call.1} parent=1 // pred_check
      _
    $region23: #{tpu_custom_call.1} parent=1 // pred_check_branch
      %57 = sbr.rel (0) target = $region25
    $region24: #{tpu_custom_call.1} parent=1 // pred_region
      %59 = dma.done [#allocation3], 128
    $region25: #{tpu_custom_call.1} parent=1 // pred_fallthru
      _
    // Predicated region
    $region26: #{tpu_custom_call.1} parent=1 // pred_check
      _
    $region27: #{tpu_custom_call.1} parent=1 // pred_check_branch
      %61 = sbr.rel (0) target = $region29
    $region28: #{tpu_custom_call.1} parent=1 // pred_region
      %63 = dma.done [#allocation6], 1024
    $region29: #{tpu_custom_call.1} parent=1 // pred_fallthru
      _
    // Predicated region
    $region30: #{tpu_custom_call.1} parent=1 // pred_check
      _
    $region31: #{tpu_custom_call.1} parent=1 // pred_check_branch
      %65 = sbr.rel (0) target = $region33
    $region32: #{tpu_custom_call.1} parent=1 // pred_region
      %67 = dma.done [#allocation6], 1024
    $region33: #{tpu_custom_call.1} parent=1 // pred_fallthru
      _
    %v68 = vld [vmem:[#allocation2] sm:$0xf]
    %v69 = vld [vmem:[#allocation2 + $0x4] sm:$0xf]
    %v70 = vld [vmem:[#allocation5] sm:$0xf]
    %v71 = vld [vmem:[#allocation5 + $0x4] sm:$0xf]
    %v72 = vld [vmem:[#allocation5 + $0x8] sm:$0xf]
    %v73 = vld [vmem:[#allocation5 + $0xc] sm:$0xf]
    %v74 = vld [vmem:[#allocation5 + $0x10] sm:$0xf]
    %v75 = vld [vmem:[#allocation5 + $0x14] sm:$0xf]
    %v76 = vld [vmem:[#allocation5 + $0x18] sm:$0xf]
    %v77 = vld [vmem:[#allocation5 + $0x1c] sm:$0xf]
    %v78 = vld [vmem:[#allocation5 + $0x20] sm:$0xf]
    %v79 = vld [vmem:[#allocation5 + $0x24] sm:$0xf]
    %v80 = vld [vmem:[#allocation5 + $0x28] sm:$0xf]
    %v81 = vld [vmem:[#allocation5 + $0x2c] sm:$0xf]
    %v82 = vld [vmem:[#allocation5 + $0x30] sm:$0xf]
    %v83 = vld [vmem:[#allocation5 + $0x34] sm:$0xf]
    %v84 = vld [vmem:[#allocation5 + $0x38] sm:$0xf]
    %v85 = vld [vmem:[#allocation5 + $0x3c] sm:$0xf]
    %v86 = vld [vmem:[%s2] sm:$0x1]
    %v88 = vperm.slane %v86, 0
    %v92 = vunpack.c.l.b16 %v68
    %v93 = vunpack.c.l.b16 %v69
    %v94 = vpack.c.b16 %v93, %v92
    %v112 = vunpack.c.l.b16 %v70
    %v113 = vunpack.c.l.b16 %v71
    %v114 = vunpack.c.l.b16 %v72
    %v115 = vunpack.c.l.b16 %v73
    %v116 = vunpack.c.l.b16 %v74
    %v117 = vunpack.c.l.b16 %v75
    %v118 = vunpack.c.l.b16 %v76
    %v119 = vunpack.c.l.b16 %v77
    %v120 = vunpack.c.l.b16 %v78
    %v121 = vunpack.c.l.b16 %v79
    %v122 = vunpack.c.l.b16 %v80
    %v123 = vunpack.c.l.b16 %v81
    %v124 = vunpack.c.l.b16 %v82
    %v125 = vunpack.c.l.b16 %v83
    %v126 = vunpack.c.l.b16 %v84
    %v127 = vunpack.c.l.b16 %v85
    %v128 = vpack.c.b16 %v113, %v112
    %v129 = vpack.c.b16 %v115, %v114
    %v130 = vpack.c.b16 %v117, %v116
    %v131 = vpack.c.b16 %v119, %v118
    %v132 = vpack.c.b16 %v121, %v120
    %v133 = vpack.c.b16 %v123, %v122
    %v134 = vpack.c.b16 %v125, %v124
    %v135 = vpack.c.b16 %v127, %v126
    %144 = vmatpush.bf16.msra.mxu0 %v135
    %145 = vmatpush.bf16.msra.mxu0 %v134
    %146 = vmatpush.bf16.msra.mxu0 %v133
    %147 = vmatpush.bf16.msra.mxu0 %v132
    %148 = vmatpush.bf16.msra.mxu0 %v131
    %149 = vmatpush.bf16.msra.mxu0 %v130
    %150 = vmatpush.bf16.msra.mxu0 %v129
    %151 = vmatpush.bf16.msra.mxu0 %v128
    %152 = vmatmul.bf16.gmra.mxu0 %v94
    %v153 = vpop.f32.mrf.mxu0
    %v154 = vadd.f32 %v88, %v153
    %v155 = vpop.f32.mrf.mxu0
    %v156 = vadd.f32 %v88, %v155
    %157 = vdwg.mxu0
    %v158 = vmax.f32 %v154, 0.0
    %v159 = vmax.f32 %v156, 0.0
    %v160 = vld [vmem:[#allocation7] sm:$0xf]
    %v161 = vld [vmem:[#allocation7 + $0x4] sm:$0xf]
    %v162 = vld [vmem:[#allocation7 + $0x8] sm:$0xf]
    %v163 = vld [vmem:[#allocation7 + $0xc] sm:$0xf]
    %v164 = vld [vmem:[#allocation7 + $0x10] sm:$0xf]
    %v165 = vld [vmem:[#allocation7 + $0x14] sm:$0xf]
    %v166 = vld [vmem:[#allocation7 + $0x18] sm:$0xf]
    %v167 = vld [vmem:[#allocation7 + $0x1c] sm:$0xf]
    %v168 = vld [vmem:[#allocation7 + $0x20] sm:$0xf]
    %v169 = vld [vmem:[#allocation7 + $0x24] sm:$0xf]
    %v170 = vld [vmem:[#allocation7 + $0x28] sm:$0xf]
    %v171 = vld [vmem:[#allocation7 + $0x2c] sm:$0xf]
    %v172 = vld [vmem:[#allocation7 + $0x30] sm:$0xf]
    %v173 = vld [vmem:[#allocation7 + $0x34] sm:$0xf]
    %v174 = vld [vmem:[#allocation7 + $0x38] sm:$0xf]
    %v175 = vld [vmem:[#allocation7 + $0x3c] sm:$0xf]
    %v176 = vld [vmem:[%s4] sm:$0x1]
    %v177 = vpack.c.bf16 %v159, %v158
    %v179 = vperm.slane %v176, 0
    %v197 = vunpack.c.l.b16 %v160
    %v198 = vunpack.c.l.b16 %v161
    %v199 = vunpack.c.l.b16 %v162
    %v200 = vunpack.c.l.b16 %v163
    %v201 = vunpack.c.l.b16 %v164
    %v202 = vunpack.c.l.b16 %v165
    %v203 = vunpack.c.l.b16 %v166
    %v204 = vunpack.c.l.b16 %v167
    %v205 = vunpack.c.l.b16 %v168
    %v206 = vunpack.c.l.b16 %v169
    %v207 = vunpack.c.l.b16 %v170
    %v208 = vunpack.c.l.b16 %v171
    %v209 = vunpack.c.l.b16 %v172
    %v210 = vunpack.c.l.b16 %v173
    %v211 = vunpack.c.l.b16 %v174
    %v212 = vunpack.c.l.b16 %v175
    %v213 = vpack.c.b16 %v198, %v197
    %v214 = vpack.c.b16 %v200, %v199
    %v215 = vpack.c.b16 %v202, %v201
    %v216 = vpack.c.b16 %v204, %v203
    %v217 = vpack.c.b16 %v206, %v205
    %v218 = vpack.c.b16 %v208, %v207
    %v219 = vpack.c.b16 %v210, %v209
    %v220 = vpack.c.b16 %v212, %v211
    %229 = vmatpush.bf16.msra.mxu0 %v220
    %230 = vmatpush.bf16.msra.mxu0 %v219
    %231 = vmatpush.bf16.msra.mxu0 %v218
    %232 = vmatpush.bf16.msra.mxu0 %v217
    %233 = vmatpush.bf16.msra.mxu0 %v216
    %234 = vmatpush.bf16.msra.mxu0 %v215
    %235 = vmatpush.bf16.msra.mxu0 %v214
    %236 = vmatpush.bf16.msra.mxu0 %v213
    %237 = vmatmul.bf16.gmra.mxu0 %v177
    %v238 = vpop.f32.mrf.mxu0
    %v239 = vadd.f32 %v179, %v238
    %v240 = vpop.f32.mrf.mxu0
    %v241 = vadd.f32 %v179, %v240
    %242 = vdwg.mxu0
    %v243 = vmul.f32 %v239, %v239
    %v244 = vmul.f32 %v241, %v241
    %245 = vadd.xlane.f32.xlu0 %v243
    %v246 = vpop.xlane.xlu0 %245
    %247 = vadd.xlane.f32.xlu0 %v244
    %v248 = vpop.xlane.xlu0 %247
    %v249 = vmax.f32 %v246, 1e-24
    %v250 = vmax.f32 %v248, 1e-24
    %v251 = vrsqrt.pop %v249
    %v252 = vmul.f32 %v251, %v249
    %v253 = vmul.f32 %v252, %v251
    %v254 = vmul.f32 0.5, %v253
    %v255 = vsub.f32 1.5, %v254
    %v256 = vmul.f32 %v251, %v255
    %vm257 = vweird.f32 %v249
    %vm258 = vweird.f32 %v251
    %vm259 = vmor %vm257, %vm258
    %v260 = vsel %vm259, %v251, %v256
    %v261 = vrsqrt.pop %v250
    %v262 = vmul.f32 %v261, %v250
    %v263 = vmul.f32 %v262, %v261
    %v264 = vmul.f32 0.5, %v263
    %v265 = vsub.f32 1.5, %v264
    %v266 = vmul.f32 %v261, %v265
    %vm267 = vweird.f32 %v250
    %vm268 = vweird.f32 %v261
    %vm269 = vmor %vm267, %vm268
    %v270 = vsel %vm269, %v261, %v266
    %v271 = vmul.f32 %v239, %v260
    %v272 = vmul.f32 %v241, %v270
    %273 = vst [vmem:[#allocation8] sm:$0xff] %v271
    %274 = vst [vmem:[#allocation8 + $0x8] sm:$0xff] %v272
    // Predicated region
    $region34: #{tpu_custom_call.1} parent=1 // pred_check
      _
    $region35: #{tpu_custom_call.1} parent=1 // pred_check_branch
      %276 = sbr.rel (0) target = $region37
    $region36: #{tpu_custom_call.1} parent=1 // pred_region
      %278 = vsyncadd [#allocation4], 0
      %s279 = sshll.u32 [#allocation8], 4
      %s280 = int_to_ptr.vmem [resolvable:$true] %s279
      %s281 = sshll.u32 %s5, 4
      %s282 = int_to_ptr.hbm [resolvable:$true] %s281
      %287 = dma.vmem_to_hbm [thread:$0]  %s280, 256, %s282, [#allocation4], 128, 128, 8
    $region37: #{tpu_custom_call.1} parent=1 // pred_fallthru
      _
    // Predicated region
    $region38: #{tpu_custom_call.1} parent=1 // pred_check
      _
    $region39: #{tpu_custom_call.1} parent=1 // pred_check_branch
      %289 = sbr.rel (0) target = $region41
    $region40: #{tpu_custom_call.1} parent=1 // pred_region
      %291 = dma.done [#allocation4], 256
    $region41: #{tpu_custom_call.1} parent=1 // pred_fallthru
      _
    %292 = vsyncpa [#allocation3], 1
    %293 = vsyncpa [#allocation6], 1
    %294 = vsyncpa [#allocation4], 1

// kernel: tpu_custom_call.1
$region0: #{tpu_custom_call.1}
  #allocation0 [shape = 'u32[]', space=smem, size = 0x4, offset = 0x4, fixed_abs, tag = 'smem constant byte address 0x4 - core index']
  #allocation1 [shape = 'u32[72,128]{1,0:T(1,128)}', space=vmem, size = 0x9000, scoped, tag = 'internal scratch']
  %s0 = inlined_call_operand.hbm [shape: bf16[16,128], index: 0, kind: input, shape index: {}]
  %s1 = inlined_call_operand.hbm [shape: bf16[128,128], index: 1, kind: input, shape index: {}]
  %s2 = inlined_call_operand.vmem [shape: f32[1,128], index: 2, kind: input, shape index: {}]
  %s3 = inlined_call_operand.hbm [shape: bf16[128,128], index: 3, kind: input, shape index: {}]
  %s4 = inlined_call_operand.vmem [shape: f32[1,128], index: 4, kind: input, shape index: {}]
  %s5 = inlined_call_operand.hbm [shape: f32[16,128], index: 5, kind: output, shape index: {}]
  %s6 = sld [smem:[#allocation0]]
  $region42: #{tpu_custom_call.1} parent=0
    _
  %s8 = ssub.s32 1, %s6
  %s9 = scalar_select 0, %s8, %s6
  $region1: #{tpu_custom_call.1} parent=0
    #allocation2 [shape = 'u8[4096]{0}', space=vmem, size = 0x1000, scoped, tag = 'input window, operand 0, single buffered']
    #allocation3 [shape = 's32[1]{0}', space=sflag, size = 0x4, scoped, tag = 'scoped memory for tpu_custom_call.1']
    #allocation4 [shape = 's32[1]{0}', space=sflag, size = 0x4, scoped, tag = 'scoped memory for tpu_custom_call.1']
    #allocation5 [shape = 'u8[32768]{0}', space=vmem, size = 0x8000, scoped, tag = 'input window, operand 1, single buffered']
    #allocation6 [shape = 's32[1]{0}', space=sflag, size = 0x4, scoped, tag = 'scoped memory for tpu_custom_call.1']
    #allocation7 [shape = 'u8[32768]{0}', space=vmem, size = 0x8000, scoped, tag = 'input window, operand 3, single buffered']
    #allocation8 [shape = 'u8[8192]{0}', space=vmem, size = 0x2000, scoped, tag = 'output window, operand 0, single buffered']
    %10 = vsyncpa [#allocation3], 0
    %11 = vsyncpa [#allocation6], 0
    %12 = vsyncpa [#allocation4], 0
    // Predicated region
    $region2: #{tpu_custom_call.1} parent=1 // pred_check
      _
    $region3: #{tpu_custom_call.1} parent=1 // pred_check_branch
      %14 = sbr.rel (0) target = $region5
    $region4: #{tpu_custom_call.1} parent=1 // pred_region
      %16 = vsyncadd [#allocation3], 0
      %s17 = sshll.u32 %s0, 4
      %s18 = int_to_ptr.hbm [resolvable:$true] %s17
      %s19 = sshll.u32 [#allocation2], 4
      %s20 = int_to_ptr.vmem [resolvable:$true] %s19
      %25 = dma.hbm_to_vmem [thread:$0]  %s18, 128, %s20, [#allocation3], 64, 64, 4
    $region5: #{tpu_custom_call.1} parent=1 // pred_fallthru
      _
    // Predicated region
    $region6: #{tpu_custom_call.1} parent=1 // pred_check
      _
    $region7: #{tpu_custom_call.1} parent=1 // pred_check_branch
      %27 = sbr.rel (0) target = $region9
    $region8: #{tpu_custom_call.1} parent=1 // pred_region
      %29 = vsyncadd [#allocation6], 0
      %s30 = sshll.u32 %s1, 4
      %s31 = int_to_ptr.hbm [resolvable:$true] %s30
      %s32 = sshll.u32 [#allocation5], 4
      %s33 = int_to_ptr.vmem [resolvable:$true] %s32
      %38 = dma.hbm_to_vmem [thread:$0]  %s31, 1024, %s33, [#allocation6], 64, 64, 4
    $region9: #{tpu_custom_call.1} parent=1 // pred_fallthru
      _
    // Predicated region
    $region10: #{tpu_custom_call.1} parent=1 // pred_check
      _
    $region11: #{tpu_custom_call.1} parent=1 // pred_check_branch
      %40 = sbr.rel (0) target = $region13
    $region12: #{tpu_custom_call.1} parent=1 // pred_region
      _
    $region13: #{tpu_custom_call.1} parent=1 // pred_fallthru
      _
    // Predicated region
    $region14: #{tpu_custom_call.1} parent=1 // pred_check
      _
    $region15: #{tpu_custom_call.1} parent=1 // pred_check_branch
      %42 = sbr.rel (0) target = $region17
    $region16: #{tpu_custom_call.1} parent=1 // pred_region
      %44 = vsyncadd [#allocation6], 0
      %s45 = sshll.u32 %s3, 4
      %s46 = int_to_ptr.hbm [resolvable:$true] %s45
      %s47 = sshll.u32 [#allocation7], 4
      %s48 = int_to_ptr.vmem [resolvable:$true] %s47
      %53 = dma.hbm_to_vmem [thread:$0]  %s46, 1024, %s48, [#allocation6], 64, 64, 4
    $region17: #{tpu_custom_call.1} parent=1 // pred_fallthru
      _
    // Predicated region
    $region18: #{tpu_custom_call.1} parent=1 // pred_check
      _
    $region19: #{tpu_custom_call.1} parent=1 // pred_check_branch
      %55 = sbr.rel (0) target = $region21
    $region20: #{tpu_custom_call.1} parent=1 // pred_region
      _
    $region21: #{tpu_custom_call.1} parent=1 // pred_fallthru
      _
    // Predicated region
    $region22: #{tpu_custom_call.1} parent=1 // pred_check
      _
    $region23: #{tpu_custom_call.1} parent=1 // pred_check_branch
      %57 = sbr.rel (0) target = $region25
    $region24: #{tpu_custom_call.1} parent=1 // pred_region
      %59 = dma.done [#allocation3], 128
    $region25: #{tpu_custom_call.1} parent=1 // pred_fallthru
      _
    // Predicated region
    $region26: #{tpu_custom_call.1} parent=1 // pred_check
      _
    $region27: #{tpu_custom_call.1} parent=1 // pred_check_branch
      %61 = sbr.rel (0) target = $region29
    $region28: #{tpu_custom_call.1} parent=1 // pred_region
      %63 = dma.done [#allocation6], 1024
    $region29: #{tpu_custom_call.1} parent=1 // pred_fallthru
      _
    // Predicated region
    $region30: #{tpu_custom_call.1} parent=1 // pred_check
      _
    $region31: #{tpu_custom_call.1} parent=1 // pred_check_branch
      %65 = sbr.rel (0) target = $region33
    $region32: #{tpu_custom_call.1} parent=1 // pred_region
      %67 = dma.done [#allocation6], 1024
    $region33: #{tpu_custom_call.1} parent=1 // pred_fallthru
      _
    %v68 = vld [vmem:[#allocation2] sm:$0xf]
    %v69 = vld [vmem:[#allocation2 + $0x4] sm:$0xf]
    %v70 = vld [vmem:[#allocation5] sm:$0xf]
    %v71 = vld [vmem:[#allocation5 + $0x4] sm:$0xf]
    %v72 = vld [vmem:[#allocation5 + $0x8] sm:$0xf]
    %v73 = vld [vmem:[#allocation5 + $0xc] sm:$0xf]
    %v74 = vld [vmem:[#allocation5 + $0x10] sm:$0xf]
    %v75 = vld [vmem:[#allocation5 + $0x14] sm:$0xf]
    %v76 = vld [vmem:[#allocation5 + $0x18] sm:$0xf]
    %v77 = vld [vmem:[#allocation5 + $0x1c] sm:$0xf]
    %v78 = vld [vmem:[#allocation5 + $0x20] sm:$0xf]
    %v79 = vld [vmem:[#allocation5 + $0x24] sm:$0xf]
    %v80 = vld [vmem:[#allocation5 + $0x28] sm:$0xf]
    %v81 = vld [vmem:[#allocation5 + $0x2c] sm:$0xf]
    %v82 = vld [vmem:[#allocation5 + $0x30] sm:$0xf]
    %v83 = vld [vmem:[#allocation5 + $0x34] sm:$0xf]
    %v84 = vld [vmem:[#allocation5 + $0x38] sm:$0xf]
    %v85 = vld [vmem:[#allocation5 + $0x3c] sm:$0xf]
    %v86 = vld [vmem:[%s2] sm:$0x1]
    %v88 = vperm.slane %v86, 0
    %v92 = vunpack.c.l.b16 %v68
    %v93 = vunpack.c.l.b16 %v69
    %v94 = vpack.c.b16 %v93, %v92
    %v112 = vunpack.c.l.b16 %v70
    %v113 = vunpack.c.l.b16 %v71
    %v114 = vunpack.c.l.b16 %v72
    %v115 = vunpack.c.l.b16 %v73
    %v116 = vunpack.c.l.b16 %v74
    %v117 = vunpack.c.l.b16 %v75
    %v118 = vunpack.c.l.b16 %v76
    %v119 = vunpack.c.l.b16 %v77
    %v120 = vunpack.c.l.b16 %v78
    %v121 = vunpack.c.l.b16 %v79
    %v122 = vunpack.c.l.b16 %v80
    %v123 = vunpack.c.l.b16 %v81
    %v124 = vunpack.c.l.b16 %v82
    %v125 = vunpack.c.l.b16 %v83
    %v126 = vunpack.c.l.b16 %v84
    %v127 = vunpack.c.l.b16 %v85
    %v128 = vpack.c.b16 %v113, %v112
    %v129 = vpack.c.b16 %v115, %v114
    %v130 = vpack.c.b16 %v117, %v116
    %v131 = vpack.c.b16 %v119, %v118
    %v132 = vpack.c.b16 %v121, %v120
    %v133 = vpack.c.b16 %v123, %v122
    %v134 = vpack.c.b16 %v125, %v124
    %v135 = vpack.c.b16 %v127, %v126
    %144 = vmatpush.bf16.msra.mxu0 %v135
    %145 = vmatpush.bf16.msra.mxu0 %v134
    %146 = vmatpush.bf16.msra.mxu0 %v133
    %147 = vmatpush.bf16.msra.mxu0 %v132
    %148 = vmatpush.bf16.msra.mxu0 %v131
    %149 = vmatpush.bf16.msra.mxu0 %v130
    %150 = vmatpush.bf16.msra.mxu0 %v129
    %151 = vmatpush.bf16.msra.mxu0 %v128
    %152 = vmatmul.bf16.gmra.mxu0 %v94
    %v153 = vpop.f32.mrf.mxu0
    %v154 = vadd.f32 %v88, %v153
    %v155 = vpop.f32.mrf.mxu0
    %v156 = vadd.f32 %v88, %v155
    %157 = vdwg.mxu0
    %v158 = vmax.f32 %v154, 0.0
    %v159 = vmax.f32 %v156, 0.0
    %v160 = vld [vmem:[#allocation7] sm:$0xf]
    %v161 = vld [vmem:[#allocation7 + $0x4] sm:$0xf]
    %v162 = vld [vmem:[#allocation7 + $0x8] sm:$0xf]
    %v163 = vld [vmem:[#allocation7 + $0xc] sm:$0xf]
    %v164 = vld [vmem:[#allocation7 + $0x10] sm:$0xf]
    %v165 = vld [vmem:[#allocation7 + $0x14] sm:$0xf]
    %v166 = vld [vmem:[#allocation7 + $0x18] sm:$0xf]
    %v167 = vld [vmem:[#allocation7 + $0x1c] sm:$0xf]
    %v168 = vld [vmem:[#allocation7 + $0x20] sm:$0xf]
    %v169 = vld [vmem:[#allocation7 + $0x24] sm:$0xf]
    %v170 = vld [vmem:[#allocation7 + $0x28] sm:$0xf]
    %v171 = vld [vmem:[#allocation7 + $0x2c] sm:$0xf]
    %v172 = vld [vmem:[#allocation7 + $0x30] sm:$0xf]
    %v173 = vld [vmem:[#allocation7 + $0x34] sm:$0xf]
    %v174 = vld [vmem:[#allocation7 + $0x38] sm:$0xf]
    %v175 = vld [vmem:[#allocation7 + $0x3c] sm:$0xf]
    %v176 = vld [vmem:[%s4] sm:$0x1]
    %v177 = vpack.c.bf16 %v159, %v158
    %v179 = vperm.slane %v176, 0
    %v197 = vunpack.c.l.b16 %v160
    %v198 = vunpack.c.l.b16 %v161
    %v199 = vunpack.c.l.b16 %v162
    %v200 = vunpack.c.l.b16 %v163
    %v201 = vunpack.c.l.b16 %v164
    %v202 = vunpack.c.l.b16 %v165
    %v203 = vunpack.c.l.b16 %v166
    %v204 = vunpack.c.l.b16 %v167
    %v205 = vunpack.c.l.b16 %v168
    %v206 = vunpack.c.l.b16 %v169
    %v207 = vunpack.c.l.b16 %v170
    %v208 = vunpack.c.l.b16 %v171
    %v209 = vunpack.c.l.b16 %v172
    %v210 = vunpack.c.l.b16 %v173
    %v211 = vunpack.c.l.b16 %v174
    %v212 = vunpack.c.l.b16 %v175
    %v213 = vpack.c.b16 %v198, %v197
    %v214 = vpack.c.b16 %v200, %v199
    %v215 = vpack.c.b16 %v202, %v201
    %v216 = vpack.c.b16 %v204, %v203
    %v217 = vpack.c.b16 %v206, %v205
    %v218 = vpack.c.b16 %v208, %v207
    %v219 = vpack.c.b16 %v210, %v209
    %v220 = vpack.c.b16 %v212, %v211
    %229 = vmatpush.bf16.msra.mxu0 %v220
    %230 = vmatpush.bf16.msra.mxu0 %v219
    %231 = vmatpush.bf16.msra.mxu0 %v218
    %232 = vmatpush.bf16.msra.mxu0 %v217
    %233 = vmatpush.bf16.msra.mxu0 %v216
    %234 = vmatpush.bf16.msra.mxu0 %v215
    %235 = vmatpush.bf16.msra.mxu0 %v214
    %236 = vmatpush.bf16.msra.mxu0 %v213
    %237 = vmatmul.bf16.gmra.mxu0 %v177
    %v238 = vpop.f32.mrf.mxu0
    %v239 = vadd.f32 %v179, %v238
    %v240 = vpop.f32.mrf.mxu0
    %v241 = vadd.f32 %v179, %v240
    %242 = vdwg.mxu0
    %v243 = vmul.f32 %v239, %v239
    %v244 = vmul.f32 %v241, %v241
    %245 = vadd.xlane.f32.xlu0 %v243
    %v246 = vpop.xlane.xlu0 %245
    %247 = vadd.xlane.f32.xlu0 %v244
    %v248 = vpop.xlane.xlu0 %247
    %v249 = vmax.f32 %v246, 1e-24
    %v250 = vmax.f32 %v248, 1e-24
    %v251 = vrsqrt.pop %v249
    %v252 = vmul.f32 %v251, %v249
    %v253 = vmul.f32 %v252, %v251
    %v254 = vmul.f32 0.5, %v253
    %v255 = vsub.f32 1.5, %v254
    %v256 = vmul.f32 %v251, %v255
    %vm257 = vweird.f32 %v249
    %vm258 = vweird.f32 %v251
    %vm259 = vmor %vm257, %vm258
    %v260 = vsel %vm259, %v251, %v256
    %v261 = vrsqrt.pop %v250
    %v262 = vmul.f32 %v261, %v250
    %v263 = vmul.f32 %v262, %v261
    %v264 = vmul.f32 0.5, %v263
    %v265 = vsub.f32 1.5, %v264
    %v266 = vmul.f32 %v261, %v265
    %vm267 = vweird.f32 %v250
    %vm268 = vweird.f32 %v261
    %vm269 = vmor %vm267, %vm268
    %v270 = vsel %vm269, %v261, %v266
    %v271 = vmul.f32 %v239, %v260
    %v272 = vmul.f32 %v241, %v270
    %273 = vst [vmem:[#allocation8] sm:$0xff] %v271
    %274 = vst [vmem:[#allocation8 + $0x8] sm:$0xff] %v272
    // Predicated region
    $region34: #{tpu_custom_call.1} parent=1 // pred_check
      _
    $region35: #{tpu_custom_call.1} parent=1 // pred_check_branch
      %276 = sbr.rel (0) target = $region37
    $region36: #{tpu_custom_call.1} parent=1 // pred_region
      %278 = vsyncadd [#allocation4], 0
      %s279 = sshll.u32 [#allocation8], 4
      %s280 = int_to_ptr.vmem [resolvable:$true] %s279
      %s281 = sshll.u32 %s5, 4
      %s282 = int_to_ptr.hbm [resolvable:$true] %s281
      %287 = dma.vmem_to_hbm [thread:$0]  %s280, 256, %s282, [#allocation4], 128, 128, 8
    $region37: #{tpu_custom_call.1} parent=1 // pred_fallthru
      _
    // Predicated region
    $region38: #{tpu_custom_call.1} parent=1 // pred_check
      _
    $region39: #{tpu_custom_call.1} parent=1 // pred_check_branch
      %289 = sbr.rel (0) target = $region41
    $region40: #{tpu_custom_call.1} parent=1 // pred_region
      %291 = dma.done [#allocation4], 256
    $region41: #{tpu_custom_call.1} parent=1 // pred_fallthru
      _
    %292 = vsyncpa [#allocation3], 1
    %293 = vsyncpa [#allocation6], 1
    %294 = vsyncpa [#allocation4], 1

</llo_original>
